<compile_context>
chip_gen: v5e
topology: v5e:2x2
jax: 0.10.0
libtpu: 0.0.40
codegen_flags: <defaults>
</compile_context>

<pallas_src>
import functools

import jax
import jax.numpy as jnp
from jax.experimental import pallas as pl
from jax.experimental.pallas import tpu as pltpu


def _round_up(v, m):
    return ((v + m - 1) // m) * m


def _npair_kernel(x_ref, xpos_ref, xnegsum_ref, out_ref, *,
                  n_actual, m_actual, tn, tm, needs_mask):
    i = pl.program_id(0)          # N tile index (parallel)
    j = pl.program_id(1)          # M tile index (reduction, "arbitrary")

    # Output block is resident across the j (reduction) axis -> accumulator.
    @pl.when(j == 0)
    def _():
        out_ref[...] = jnp.zeros_like(out_ref)

    x = x_ref[...]                                    # (TN, D), native dtype
    x_pos = xpos_ref[...]                             # (TM, D), native dtype
    xneg_sum = xnegsum_ref[...].astype(jnp.float32)   # (1, D)

    # pos tile: (TN, TM) on the MXU, f32 accumulation (no operand upcast).
    pos = jax.lax.dot_general(
        x, x_pos,
        dimension_numbers=(((1,), (1,)), ((), ())),
        preferred_element_type=jnp.float32,
    )

    # Folded negative term: (TN, 1) via VPU multiply + lane reduction.
    neg = jnp.sum(x.astype(jnp.float32) * xneg_sum, axis=-1, keepdims=True)

    # Exact division to match torch numerics (pos + neg may be ~0 -> inf/nan,
    # same as the reference).
    frac = pos / (pos + neg)

    if needs_mask:
        rows = jax.lax.broadcasted_iota(jnp.int32, (tn, tm), 0) + i * tn
        cols = jax.lax.broadcasted_iota(jnp.int32, (tn, tm), 1) + j * tm
        frac = jnp.where((rows < n_actual) & (cols < m_actual), frac, 0.0)

    # Per-row partial sums over this M tile; single store per grid step.
    out_ref[...] += jnp.sum(frac, axis=-1, keepdims=True)


def npair_loss(x, x_pos, x_neg, *, tn_max=256, tm_max=256):
    """NPairLoss with mean reduction; heavy compute in a tiled Pallas kernel."""
    n, d = x.shape
    m, _ = x_pos.shape

    # Fold the negative matmul: neg = x @ x_neg.sum(0).  This tiny (K, D) -> (1, D)
    # reduction stays in the wrapper; x_neg never enters the kernel.
    xneg_sum = jnp.sum(x_neg.astype(jnp.float32), axis=0, keepdims=True)

    # 8-aligned tiles, capped so 2x-buffered blocks fit v7x's 64 MiB VMEM too.
    tn = min(_round_up(n, 8), tn_max)
    tm = min(_round_up(m, 8), tm_max)
    n_pad = _round_up(n, tn)
    m_pad = _round_up(m, tm)

    if n_pad != n:
        x = jnp.pad(x, ((0, n_pad - n), (0, 0)))
    if m_pad != m:
        x_pos = jnp.pad(x_pos, ((0, m_pad - m), (0, 0)))

    grid = (n_pad // tn, m_pad // tm)
    kernel = functools.partial(
        _npair_kernel,
        n_actual=n, m_actual=m, tn=tn, tm=tm,
        needs_mask=(n_pad != n or m_pad != m),
    )

    row_sums = pl.pallas_call(
        kernel,
        out_shape=jax.ShapeDtypeStruct((n_pad, 1), jnp.float32),
        grid_spec=pltpu.PrefetchScalarGridSpec(
            num_scalar_prefetch=0,
            grid=grid,
            in_specs=[
                pl.BlockSpec((tn, d), lambda i, j: (i, 0)),   # x tile
                pl.BlockSpec((tm, d), lambda i, j: (j, 0)),   # x_pos tile
                pl.BlockSpec((1, d), lambda i, j: (0, 0)),    # folded neg vector
            ],
            out_specs=pl.BlockSpec((tn, 1), lambda i, j: (i, 0)),
        ),
        compiler_params=pltpu.CompilerParams(
            dimension_semantics=("parallel", "arbitrary")),
        cost_estimate=pl.CostEstimate(
            flops=2 * n_pad * m_pad * d + 2 * n_pad * d,
            transcendentals=0,
            bytes_accessed=4 * (n_pad * d + m_pad * d + d + n_pad),
        ),
    )(x, x_pos, xneg_sum)

    # Final tiny mean over N (padded rows contribute exactly 0).
    return jnp.sum(row_sums) / n


def npair_loss_ref(x, x_pos, x_neg):
    """Pure-JAX reference mirroring the PyTorch module."""
    pos = x @ x_pos.T
    neg = jnp.sum(x @ x_neg.T, axis=-1, keepdims=True)
    res = jnp.sum(pos / (pos + neg), axis=-1)
    return jnp.mean(res)


if __name__ == "__main__":
    key = jax.random.PRNGKey(0)
    k1, k2, k3 = jax.random.split(key, 3)

    N, M, K, D = 8, 8, 8, 32  # batch, #positives, #negatives, embedding dim
    x = jax.random.normal(k1, (N, D), dtype=jnp.float32)
    x_pos = jax.random.normal(k2, (M, D), dtype=jnp.float32)
    x_neg = jax.random.normal(k3, (K, D), dtype=jnp.float32)

    out = npair_loss(x, x_pos, x_neg)
    jax.block_until_ready(out)

    ref = npair_loss_ref(x, x_pos, x_neg)
    # Tolerance is slightly relaxed vs. bit-for-bit: the negative term is
    # computed as x @ sum(x_neg) (re-associated sum), which differs from the
    # reference at f32 rounding level and is amplified when pos + neg is small.
    assert jnp.allclose(out, ref, rtol=1e-3, atol=1e-3), (out, ref)

    print("KERNEL_OK")
</pallas_src>

<mosaic_0001>
module attributes {stable_mosaic.version = 11 : i64} {
  func.func @_npair_kernel(%arg0: i32, %arg1: i32, %arg2: memref<8x32xf32, #tpu.memory_space<vmem>>, %arg3: memref<8x32xf32, #tpu.memory_space<vmem>>, %arg4: memref<1x32xf32, #tpu.memory_space<vmem>>, %arg5: memref<8x1xf32, #tpu.memory_space<vmem>>) attributes {dimension_semantics = [#tpu.dimension_semantics<parallel>, #tpu.dimension_semantics<arbitrary>], iteration_bounds = array<i64: 1, 1>, scalar_prefetch = 0 : i64, scratch_operands = 0 : i64, tpu.core_type = #tpu.core_type<tc>, window_params = [{transform_indices = @transform_0, window_bounds = array<i64: 8, 32>}, {transform_indices = @transform_1, window_bounds = array<i64: 8, 32>}, {pipeline_mode = #tpu.pipeline_mode<synchronous>, transform_indices = @transform_2, window_bounds = array<i64: 1, 32>}, {transform_indices = @transform_3, window_bounds = array<i64: 8, 1>}]} {
    %c0_i32 = arith.constant 0 : i32
    %0 = arith.cmpi eq, %arg1, %c0_i32 : i32
    %1 = arith.extui %0 : i1 to i32
    %c0_i32_0 = arith.constant 0 : i32
    %2 = arith.cmpi ne, %1, %c0_i32_0 : i32
    scf.if %2 {
      %cst_12 = arith.constant 0.000000e+00 : f32
      %19 = vector.broadcast %cst_12 : f32 to vector<8x1xf32>
      %c0_13 = arith.constant 0 : index
      %c0_14 = arith.constant 0 : index
      %20 = vector.load %arg5[%c0_13, %c0_14] : memref<8x1xf32, #tpu.memory_space<vmem>>, vector<8x1xf32>
      tpu.vector_store %arg5[%c0_13, %c0_14], %19 {strides = array<i32>} : memref<8x1xf32, #tpu.memory_space<vmem>>, vector<8x1xf32>,
    } else {
    }
    %c0 = arith.constant 0 : index
    %c0_1 = arith.constant 0 : index
    %3 = vector.load %arg2[%c0, %c0_1] : memref<8x32xf32, #tpu.memory_space<vmem>>, vector<8x32xf32>
    %c0_2 = arith.constant 0 : index
    %c0_3 = arith.constant 0 : index
    %4 = vector.load %arg3[%c0_2, %c0_3] : memref<8x32xf32, #tpu.memory_space<vmem>>, vector<8x32xf32>
    %c0_4 = arith.constant 0 : index
    %c0_5 = arith.constant 0 : index
    %5 = vector.load %arg4[%c0_4, %c0_5] : memref<1x32xf32, #tpu.memory_space<vmem>>, vector<1x32xf32>
    %cst = arith.constant dense<0.000000e+00> : vector<8x8xf32>
    %6 = tpu.matmul %3, %4, %cst {dimension_numbers = #tpu.dot_dimension_numbers<[1], [1], [0], [0], [0, 0, 1, 0], [], []>} : vector<8x32xf32>, vector<8x32xf32>, vector<8x8xf32> -> vector<8x8xf32>
    %7 = vector.broadcast %5 : vector<1x32xf32> to vector<8x32xf32>
    %8 = arith.mulf %3, %7 : vector<8x32xf32>
    %cst_6 = arith.constant dense<0.000000e+00> : vector<8xf32>
    %9 = vector.multi_reduction <add>, %8, %cst_6 [1] : vector<8x32xf32> to vector<8xf32>
    %10 = vector.shape_cast %9 : vector<8xf32> to vector<8x1xf32>
    %11 = vector.broadcast %10 : vector<8x1xf32> to vector<8x8xf32>
    %12 = arith.addf %6, %11 : vector<8x8xf32>
    %13 = arith.divf %6, %12 : vector<8x8xf32>
    %c0_7 = arith.constant 0 : index
    %c0_8 = arith.constant 0 : index
    %14 = vector.load %arg5[%c0_7, %c0_8] : memref<8x1xf32, #tpu.memory_space<vmem>>, vector<8x1xf32>
    %cst_9 = arith.constant dense<0.000000e+00> : vector<8xf32>
    %15 = vector.multi_reduction <add>, %13, %cst_9 [1] : vector<8x8xf32> to vector<8xf32>
    %16 = vector.shape_cast %15 : vector<8xf32> to vector<8x1xf32>
    %17 = arith.addf %14, %16 : vector<8x1xf32>
    %c0_10 = arith.constant 0 : index
    %c0_11 = arith.constant 0 : index
    %18 = vector.load %arg5[%c0_10, %c0_11] : memref<8x1xf32, #tpu.memory_space<vmem>>, vector<8x1xf32>
    tpu.vector_store %arg5[%c0_10, %c0_11], %17 {strides = array<i32>} : memref<8x1xf32, #tpu.memory_space<vmem>>, vector<8x1xf32>,
    return
  }
  func.func @transform_0(%arg0: i32, %arg1: i32) -> (i32, i32) {
    %c0_i32 = arith.constant 0 : i32
    %c0_i32_0 = arith.constant 0 : i32
    return %arg0, %c0_i32 : i32, i32
  }
  func.func @transform_1(%arg0: i32, %arg1: i32) -> (i32, i32) {
    %c0_i32 = arith.constant 0 : i32
    %c0_i32_0 = arith.constant 0 : i32
    return %arg1, %c0_i32 : i32, i32
  }
  func.func @transform_2(%arg0: i32, %arg1: i32) -> (i32, i32) {
    %c0_i32 = arith.constant 0 : i32
    %c0_i32_0 = arith.constant 0 : i32
    %c0_i32_1 = arith.constant 0 : i32
    return %c0_i32, %c0_i32_0 : i32, i32
  }
  func.func @transform_3(%arg0: i32, %arg1: i32) -> (i32, i32) {
    %c0_i32 = arith.constant 0 : i32
    %c0_i32_0 = arith.constant 0 : i32
    return %arg0, %c0_i32 : i32, i32
  }
}

</mosaic_0001>

<llo_original>
// kernel: tpu_custom_call.1
$region0: #{tpu_custom_call.1}
  #allocation0 [shape = 'u32[]', space=smem, size = 0x4, offset = 0x4, fixed_abs, tag = 'smem constant byte address 0x4 - core index']
  #allocation1 [shape = 'u32[72,128]{1,0:T(1,128)}', space=vmem, size = 0x9000, scoped, tag = 'internal scratch']
  %s0 = inlined_call_operand.hbm [shape: f32[8,32], index: 0, kind: input, shape index: {}]
  %s1 = inlined_call_operand.hbm [shape: f32[8,32], index: 1, kind: input, shape index: {}]
  %s2 = inlined_call_operand.vmem [shape: f32[1,32], index: 2, kind: input, shape index: {}]
  %s3 = inlined_call_operand.vmem [shape: f32[8,1], index: 3, kind: output, shape index: {}]
  %s4 = sld [smem:[#allocation0]]
  $region34: #{tpu_custom_call.1} parent=0
    _
  %s6 = ssub.s32 1, %s4
  %s7 = scalar_select 0, %s6, %s4
  $region1: #{tpu_custom_call.1} parent=0
    #allocation2 [shape = 'u8[4096]{0}', space=vmem, size = 0x1000, scoped, tag = 'input window, operand 0, single buffered']
    #allocation3 [shape = 's32[1]{0}', space=sflag, size = 0x4, scoped, tag = 'scoped memory for tpu_custom_call.1']
    #allocation4 [shape = 'u8[4096]{0}', space=vmem, size = 0x1000, scoped, tag = 'input window, operand 1, single buffered']
    #allocation5 [shape = 's32[1]{0}', space=sflag, size = 0x4, scoped, tag = 'scoped memory for tpu_custom_call.1']
    %8 = vsyncpa [#allocation3], 0
    %9 = vsyncpa [#allocation5], 0
    // Predicated region
    $region2: #{tpu_custom_call.1} parent=1 // pred_check
      _
    $region3: #{tpu_custom_call.1} parent=1 // pred_check_branch
      %11 = sbr.rel (0) target = $region5
    $region4: #{tpu_custom_call.1} parent=1 // pred_region
      %13 = vsyncadd [#allocation3], 0
      %s15 = sshll.u32 %s0, 4
      %s16 = int_to_ptr.hbm [resolvable:$true] %s15
      %s17 = sshll.u32 [#allocation2], 4
      %s18 = int_to_ptr.vmem [resolvable:$true] %s17
      %20 = dma.hbm_to_vmem [thread:$0]  %s16, 128, %s18, [#allocation3]
    $region5: #{tpu_custom_call.1} parent=1 // pred_fallthru
      _
    // Predicated region
    $region6: #{tpu_custom_call.1} parent=1 // pred_check
      _
    $region7: #{tpu_custom_call.1} parent=1 // pred_check_branch
      %22 = sbr.rel (0) target = $region9
    $region8: #{tpu_custom_call.1} parent=1 // pred_region
      %24 = vsyncadd [#allocation5], 0
      %s26 = sshll.u32 %s1, 4
      %s27 = int_to_ptr.hbm [resolvable:$true] %s26
      %s28 = sshll.u32 [#allocation4], 4
      %s29 = int_to_ptr.vmem [resolvable:$true] %s28
      %31 = dma.hbm_to_vmem [thread:$0]  %s27, 128, %s29, [#allocation5]
    $region9: #{tpu_custom_call.1} parent=1 // pred_fallthru
      _
    // Predicated region
    $region10: #{tpu_custom_call.1} parent=1 // pred_check
      _
    $region11: #{tpu_custom_call.1} parent=1 // pred_check_branch
      %33 = sbr.rel (0) target = $region13
    $region12: #{tpu_custom_call.1} parent=1 // pred_region
      _
    $region13: #{tpu_custom_call.1} parent=1 // pred_fallthru
      _
    // Predicated region
    $region14: #{tpu_custom_call.1} parent=1 // pred_check
      _
    $region15: #{tpu_custom_call.1} parent=1 // pred_check_branch
      %35 = sbr.rel (0) target = $region17
    $region16: #{tpu_custom_call.1} parent=1 // pred_region
      %37 = dma.done [#allocation3], 128
    $region17: #{tpu_custom_call.1} parent=1 // pred_fallthru
      _
    // Predicated region
    $region18: #{tpu_custom_call.1} parent=1 // pred_check
      _
    $region19: #{tpu_custom_call.1} parent=1 // pred_check_branch
      %39 = sbr.rel (0) target = $region21
    $region20: #{tpu_custom_call.1} parent=1 // pred_region
      %41 = dma.done [#allocation5], 128
    $region21: #{tpu_custom_call.1} parent=1 // pred_fallthru
      _
    %p42 = scmp.eq.s32.totalorder 0, 0
    // Predicated region
    $region22: #{tpu_custom_call.1} parent=1 // pred_check
      %p43 = pneg %p42
    $region23: #{tpu_custom_call.1} parent=1 // pred_check_branch
      %45 = sbr.rel (%p43) target = $region25
    $region24: #{tpu_custom_call.1} parent=1 // pred_region
      %vm46 = vcmask 7168
      %47 = vst.msk [vmem:[%s3] sm:$0xff] %vm46, 0.0
    $region25: #{tpu_custom_call.1} parent=1 // pred_fallthru
      _
    %v48 = vld [vmem:[#allocation2] sm:$0xff]
    %v49 = vld [vmem:[#allocation4] sm:$0xff]
    %v50 = vld [vmem:[%s2] sm:$0x1]
    %vm51 = vcmask 261120
    %v53 = vsel %vm51, %v48, 0
    %v56 = vsel %vm51, %v49, 0
    %58 = vmatpush.xpose.msra.mxu0 0.0
    %59 = vmatpush.xpose.msra.mxu0 0.0
    %60 = vmatpush.xpose.msra.mxu0 0.0
    %61 = vmatpush.xpose.msra.mxu0 0.0
    %62 = vmatpush.xpose.msra.mxu0 0.0
    %63 = vmatpush.xpose.msra.mxu0 0.0
    %64 = vmatpush.xpose.msra.mxu0 0.0
    %65 = vmatpush.xpose.msra.mxu0 0.0
    %66 = vmatpush.xpose.msra.mxu0 0.0
    %67 = vmatpush.xpose.msra.mxu0 0.0
    %68 = vmatpush.xpose.msra.mxu0 0.0
    %69 = vmatpush.xpose.msra.mxu0 0.0
    %70 = vmatpush.xpose.msra.mxu0 0.0
    %71 = vmatpush.xpose.msra.mxu0 0.0
    %72 = vmatpush.xpose.msra.mxu0 0.0
    %73 = vmatpush.xpose.msra.mxu0 %v56
    %74 = vmatmul.f32.gmra.mxu0 %v53
    %v75 = vpop.f32.mrf.mxu0
    %v76 = vadd.f32 0.0, %v75
    %77 = vdwg.mxu0
    %v79 = vperm.slane %v50, 0
    %v81 = vmul.f32 %v48, %v79
    %v82 = vsel %vm51, %v81, 0.0
    %83 = vadd.xlane.f32.xlu0 %v82
    %v84 = vpop.xlane.xlu0 %83
    %v85 = vadd.f32 %v76, %v84
    %v86 = vrcp.pop %v85
    %v87 = vmul.f32 %v85, %v86
    %v88 = vsub.f32 1.0, %v87
    %v89 = vmul.f32 %v86, %v88
    %v90 = vadd.f32 %v86, %v89
    %vm91 = vweird.f32 %v85
    %vm92 = vweird.f32 %v86
    %vm93 = vmor %vm91, %vm92
    %v94 = vsel %vm93, %v86, %v90
    %v95 = vand.u32 2147483647, %v85
    %vm96 = vcmp.eq.f32.partialorder %v95, 8.507059e+37
    %v97 = vand.u32 %v85, 2147483648
    %v98 = vor.u32 1.1754944e-38, %v97
    %v99 = vsel %vm96, %v98, %v94
    %v100 = vmul.f32 %v76, %v99
    %v101 = vld [vmem:[%s3] sm:$0xff]
    %vm102 = vcmask 64512
    %v103 = vsel %vm102, %v100, 0.0
    %104 = vadd.xlane.f32.xlu0 %v103
    %v105 = vpop.xlane.xlu0 %104
    %v106 = vadd.f32 %v101, %v105
    %vm107 = vcmask 7168
    %108 = vst.msk [vmem:[%s3] sm:$0xff] %vm107, %v106
    // Predicated region
    $region26: #{tpu_custom_call.1} parent=1 // pred_check
      _
    $region27: #{tpu_custom_call.1} parent=1 // pred_check_branch
      %110 = sbr.rel (0) target = $region29
    $region28: #{tpu_custom_call.1} parent=1 // pred_region
      _
    $region29: #{tpu_custom_call.1} parent=1 // pred_fallthru
      _
    // Predicated region
    $region30: #{tpu_custom_call.1} parent=1 // pred_check
      _
    $region31: #{tpu_custom_call.1} parent=1 // pred_check_branch
      %112 = sbr.rel (0) target = $region33
    $region32: #{tpu_custom_call.1} parent=1 // pred_region
      _
    $region33: #{tpu_custom_call.1} parent=1 // pred_fallthru
      _
    %113 = vsyncpa [#allocation3], 1
    %114 = vsyncpa [#allocation5], 1

</llo_original>
